<compile_context>
chip_gen: v5e
topology: v5e:2x2
jax: 0.10.0
libtpu: 0.0.40
codegen_flags: <defaults>
</compile_context>

<pallas_src>
import functools

import jax
import jax.numpy as jnp
from jax.experimental import pallas as pl
from jax.experimental.pallas import tpu as pltpu


def _round_up(a, b):
    return (a + b - 1) // b * b


def noise_ff_kernel(x_ref, w1_ref, w2_ref, out_ref, acc_ref):
    """Grid = (rows, dff-chunks).  Accumulate over the dff axis.

    x_ref   : (tm, dmodel_pad)       — row tile of activations
    w1_ref  : (tf, dmodel_pad)       — dff-chunk of blended lin1 weight
    w2_ref  : (dmodel_pad, tf)       — dff-chunk of blended lin2 weight
    out_ref : (tm, dmodel_pad)
    acc_ref : (tm, dmodel_pad) f32   — persistent accumulator across dff chunks
    """
    j = pl.program_id(1)

    @pl.when(j == 0)
    def _():
        acc_ref[...] = jnp.zeros_like(acc_ref)

    # h_j = relu(x @ w1_j^T): contract last dims of both operands (no transpose).
    h = jax.lax.dot_general(
        x_ref[...], w1_ref[...],
        dimension_numbers=(((1,), (1,)), ((), ())),
        preferred_element_type=jnp.float32)
    h = jnp.maximum(h, 0.0)                                   # (tm, tf)

    # acc += h_j @ w2_j^T: again contract last dims (w2 tile is (dmodel, tf)).
    acc_ref[...] += jax.lax.dot_general(
        h, w2_ref[...],
        dimension_numbers=(((1,), (1,)), ((), ())),
        preferred_element_type=jnp.float32)                   # (tm, dmodel_pad)

    @pl.when(j == pl.num_programs(1) - 1)
    def _():
        out_ref[...] = acc_ref[...].astype(out_ref.dtype)


def noise_ff_forward(x, w1, frozen_w1, w2, frozen_w2, mask, alpha, *, tm=None):
    """x: (batch, seq, dmodel) float32. Returns (batch, seq, dmodel)."""
    batch, seq, dmodel = x.shape
    dff = w1.shape[0]
    T = batch * seq

    # ---- blend the weights ONCE, outside the kernel (review opt 1b + 2) ----
    # w_eff = w * (m + (1-m)*alpha) + frozen_w * ((1-m)*(1-alpha))
    mask = mask.astype(jnp.float32)
    alpha = jnp.float32(alpha)
    s_keep = mask + (1.0 - mask) * alpha           # (dff,)
    s_frozen = (1.0 - mask) * (1.0 - alpha)        # (dff,)
    w1_eff = w1 * s_keep[:, None] + frozen_w1 * s_frozen[:, None]   # (dff, dmodel)
    w2_eff = w2 * s_keep[None, :] + frozen_w2 * s_frozen[None, :]   # (dmodel, dff)

    # ---- pad to TPU-friendly shapes (lane-dense last dims) ----
    dmodel_p = _round_up(dmodel, 128)
    dff_p = _round_up(dff, 128)
    if tm is None:
        tm = min(256, _round_up(T, 8))             # multiple of 8 (f32 sublane)
    T_p = _round_up(T, tm)

    x2d = x.reshape(T, dmodel)
    x2d = jnp.pad(x2d, ((0, T_p - T), (0, dmodel_p - dmodel)))
    w1_eff = jnp.pad(w1_eff, ((0, dff_p - dff), (0, dmodel_p - dmodel)))
    w2_eff = jnp.pad(w2_eff, ((0, dmodel_p - dmodel), (0, dff_p - dff)))

    # dff chunk size: largest of {512, 256, 128} that divides dff_p.
    if dff_p % 512 == 0:
        tf = 512
    elif dff_p % 256 == 0:
        tf = 256
    else:
        tf = 128
    tf = min(tf, dff_p)

    grid = (T_p // tm, dff_p // tf)

    out2d = pl.pallas_call(
        noise_ff_kernel,
        out_shape=jax.ShapeDtypeStruct((T_p, dmodel_p), x.dtype),
        grid_spec=pltpu.PrefetchScalarGridSpec(
            num_scalar_prefetch=0,
            grid=grid,
            in_specs=[
                # activations: tiled along rows, invariant across dff axis
                pl.BlockSpec((tm, dmodel_p), lambda i, j: (i, 0)),
                # blended lin1 weight: tiled along dff
                pl.BlockSpec((tf, dmodel_p), lambda i, j: (j, 0)),
                # blended lin2 weight: tiled along dff
                pl.BlockSpec((dmodel_p, tf), lambda i, j: (0, j)),
            ],
            out_specs=pl.BlockSpec((tm, dmodel_p), lambda i, j: (i, 0)),
            scratch_shapes=[pltpu.VMEM((tm, dmodel_p), jnp.float32)],
        ),
        compiler_params=pltpu.CompilerParams(
            dimension_semantics=("parallel", "arbitrary"),
            vmem_limit_bytes=48 * 1024 * 1024,
        ),
    )(x2d, w1_eff, w2_eff)

    return out2d[:T, :dmodel].reshape(batch, seq, dmodel)


def noise_ff_reference(x, w1, frozen_w1, w2, frozen_w2, mask, alpha):
    """Plain-JAX reference mirroring the PyTorch forward."""
    noisy1 = (1.0 - alpha) * frozen_w1 + alpha * w1
    w1_eff = mask[:, None] * w1 + (1.0 - mask[:, None]) * noisy1
    h = jax.nn.relu(jnp.einsum("bsd,fd->bsf", x, w1_eff))
    noisy2 = (1.0 - alpha) * frozen_w2 + alpha * w2
    w2_eff = mask[None, :] * w2 + (1.0 - mask[None, :]) * noisy2
    return jnp.einsum("bsf,df->bsd", h, w2_eff)


if __name__ == "__main__":
    # Small shapes consistent with the module: dmodel=32, dff=64, batch=2, seq=8.
    batch, seq, dmodel, dff = 2, 8, 32, 64

    key = jax.random.PRNGKey(0)
    kx, kw1, kf1, kw2, kf2, km = jax.random.split(key, 6)

    x = jax.random.normal(kx, (batch, seq, dmodel), dtype=jnp.float32)
    # PyTorch Linear weight shapes: lin1.weight (dff, dmodel), lin2.weight (dmodel, dff)
    w1 = jax.random.normal(kw1, (dff, dmodel), dtype=jnp.float32) * (1.0 / dmodel ** 0.5)
    frozen_w1 = jax.random.normal(kf1, (dff, dmodel), dtype=jnp.float32) * (1.0 / dmodel ** 0.5)
    w2 = jax.random.normal(kw2, (dmodel, dff), dtype=jnp.float32) * (1.0 / dff ** 0.5)
    frozen_w2 = jax.random.normal(kf2, (dmodel, dff), dtype=jnp.float32) * (1.0 / dff ** 0.5)

    # Exercise the interpolation path: non-trivial mask and alpha (noise_enabled regime).
    mask = (jax.random.uniform(km, (dff,)) > 0.25).astype(jnp.float32)
    alpha = 0.375

    fwd = jax.jit(functools.partial(noise_ff_forward))
    out = jax.block_until_ready(fwd(x, w1, frozen_w1, w2, frozen_w2, mask, alpha))

    ref = noise_ff_reference(x, w1, frozen_w1, w2, frozen_w2, mask, alpha)
    assert out.shape == (batch, seq, dmodel)
    assert jnp.allclose(out, ref, atol=1e-4, rtol=1e-4), "mismatch vs reference"

    # Also check the default (alpha=1, mask=1) path == plain two-layer relu MLP.
    ones = jnp.ones((dff,), jnp.float32)
    out_default = jax.block_until_ready(
        fwd(x, w1, frozen_w1, w2, frozen_w2, ones, 1.0))
    ref_default = noise_ff_reference(x, w1, frozen_w1, w2, frozen_w2, ones, 1.0)
    assert jnp.allclose(out_default, ref_default, atol=1e-4, rtol=1e-4)

    print("KERNEL_OK")
</pallas_src>

<mosaic_0001>
module attributes {stable_mosaic.version = 11 : i64} {
  func.func @noise_ff_kernel(%arg0: i32, %arg1: i32, %arg2: memref<16x128xf32, #tpu.memory_space<vmem>>, %arg3: memref<128x128xf32, #tpu.memory_space<vmem>>, %arg4: memref<128x128xf32, #tpu.memory_space<vmem>>, %arg5: memref<16x128xf32, #tpu.memory_space<vmem>>, %arg6: memref<16x128xf32, #tpu.memory_space<vmem>>) attributes {dimension_semantics = [#tpu.dimension_semantics<parallel>, #tpu.dimension_semantics<arbitrary>], iteration_bounds = array<i64: 1, 1>, scalar_prefetch = 0 : i64, scratch_operands = 1 : i64, tpu.core_type = #tpu.core_type<tc>, window_params = [{transform_indices = @transform_0, window_bounds = array<i64: 16, 128>}, {transform_indices = @transform_1, window_bounds = array<i64: 128, 128>}, {transform_indices = @transform_2, window_bounds = array<i64: 128, 128>}, {transform_indices = @transform_3, window_bounds = array<i64: 16, 128>}]} {
    %c0_i32 = arith.constant 0 : i32
    %0 = arith.cmpi eq, %arg1, %c0_i32 : i32
    %1 = arith.extui %0 : i1 to i32
    %c0_i32_0 = arith.constant 0 : i32
    %2 = arith.cmpi ne, %1, %c0_i32_0 : i32
    scf.if %2 {
      %cst_14 = arith.constant 0.000000e+00 : f32
      %16 = vector.broadcast %cst_14 : f32 to vector<16x128xf32>
      %c0_15 = arith.constant 0 : index
      %c0_16 = arith.constant 0 : index
      %17 = vector.load %arg6[%c0_15, %c0_16] : memref<16x128xf32, #tpu.memory_space<vmem>>, vector<16x128xf32>
      tpu.vector_store %arg6[%c0_15, %c0_16], %16 {strides = array<i32>} : memref<16x128xf32, #tpu.memory_space<vmem>>, vector<16x128xf32>,
    } else {
    }
    %c0 = arith.constant 0 : index
    %c0_1 = arith.constant 0 : index
    %3 = vector.load %arg2[%c0, %c0_1] : memref<16x128xf32, #tpu.memory_space<vmem>>, vector<16x128xf32>
    %c0_2 = arith.constant 0 : index
    %c0_3 = arith.constant 0 : index
    %4 = vector.load %arg3[%c0_2, %c0_3] : memref<128x128xf32, #tpu.memory_space<vmem>>, vector<128x128xf32>
    %cst = arith.constant dense<0.000000e+00> : vector<16x128xf32>
    %5 = tpu.matmul %3, %4, %cst {dimension_numbers = #tpu.dot_dimension_numbers<[1], [1], [0], [0], [0, 0, 1, 0], [], []>} : vector<16x128xf32>, vector<128x128xf32>, vector<16x128xf32> -> vector<16x128xf32>
    %cst_4 = arith.constant 0.000000e+00 : f32
    %6 = vector.broadcast %cst_4 : f32 to vector<16x128xf32>
    %7 = arith.maximumf %5, %6 : vector<16x128xf32>
    %c0_5 = arith.constant 0 : index
    %c0_6 = arith.constant 0 : index
    %8 = vector.load %arg6[%c0_5, %c0_6] : memref<16x128xf32, #tpu.memory_space<vmem>>, vector<16x128xf32>
    %c0_7 = arith.constant 0 : index
    %c0_8 = arith.constant 0 : index
    %9 = vector.load %arg4[%c0_7, %c0_8] : memref<128x128xf32, #tpu.memory_space<vmem>>, vector<128x128xf32>
    %cst_9 = arith.constant dense<0.000000e+00> : vector<16x128xf32>
    %10 = tpu.matmul %7, %9, %cst_9 {dimension_numbers = #tpu.dot_dimension_numbers<[1], [1], [0], [0], [0, 0, 1, 0], [], []>} : vector<16x128xf32>, vector<128x128xf32>, vector<16x128xf32> -> vector<16x128xf32>
    %11 = arith.addf %8, %10 : vector<16x128xf32>
    %c0_10 = arith.constant 0 : index
    %c0_11 = arith.constant 0 : index
    %12 = vector.load %arg6[%c0_10, %c0_11] : memref<16x128xf32, #tpu.memory_space<vmem>>, vector<16x128xf32>
    tpu.vector_store %arg6[%c0_10, %c0_11], %11 {strides = array<i32>} : memref<16x128xf32, #tpu.memory_space<vmem>>, vector<16x128xf32>,
    %c0_i32_12 = arith.constant 0 : i32
    %13 = arith.cmpi eq, %arg1, %c0_i32_12 : i32
    %14 = arith.extui %13 : i1 to i32
    %c0_i32_13 = arith.constant 0 : i32
    %15 = arith.cmpi ne, %14, %c0_i32_13 : i32
    scf.if %15 {
      %c0_14 = arith.constant 0 : index
      %c0_15 = arith.constant 0 : index
      %16 = vector.load %arg6[%c0_14, %c0_15] : memref<16x128xf32, #tpu.memory_space<vmem>>, vector<16x128xf32>
      %c0_16 = arith.constant 0 : index
      %c0_17 = arith.constant 0 : index
      %17 = vector.load %arg5[%c0_16, %c0_17] : memref<16x128xf32, #tpu.memory_space<vmem>>, vector<16x128xf32>
      tpu.vector_store %arg5[%c0_16, %c0_17], %16 {strides = array<i32>} : memref<16x128xf32, #tpu.memory_space<vmem>>, vector<16x128xf32>,
    } else {
    }
    return
  }
  func.func @transform_0(%arg0: i32, %arg1: i32) -> (i32, i32) {
    %c0_i32 = arith.constant 0 : i32
    %c0_i32_0 = arith.constant 0 : i32
    return %arg0, %c0_i32 : i32, i32
  }
  func.func @transform_1(%arg0: i32, %arg1: i32) -> (i32, i32) {
    %c0_i32 = arith.constant 0 : i32
    %c0_i32_0 = arith.constant 0 : i32
    return %arg1, %c0_i32 : i32, i32
  }
  func.func @transform_2(%arg0: i32, %arg1: i32) -> (i32, i32) {
    %c0_i32 = arith.constant 0 : i32
    %c0_i32_0 = arith.constant 0 : i32
    return %c0_i32, %arg1 : i32, i32
  }
  func.func @transform_3(%arg0: i32, %arg1: i32) -> (i32, i32) {
    %c0_i32 = arith.constant 0 : i32
    %c0_i32_0 = arith.constant 0 : i32
    return %arg0, %c0_i32 : i32, i32
  }
}

</mosaic_0001>

<llo_original>
// kernel: noise_ff_forward.1
$region0: #{noise_ff_forward.1}
  #allocation0 [shape = 'u32[]', space=smem, size = 0x4, offset = 0x4, fixed_abs, tag = 'smem constant byte address 0x4 - core index']
  #allocation1 [shape = 'u32[72,128]{1,0:T(1,128)}', space=vmem, size = 0x9000, scoped, tag = 'internal scratch']
  #allocation2 [shape = 'f32[16,128]{1,0:T(8,128)}', space=vmem, size = 0x2000, scoped, tag = 'scratch operand']
  %s0 = inlined_call_operand.vmem [shape: f32[16,128], index: 0, kind: input, shape index: {}]
  %s1 = inlined_call_operand.vmem [shape: f32[128,128], index: 1, kind: input, shape index: {}]
  %s2 = inlined_call_operand.vmem [shape: f32[128,128], index: 2, kind: input, shape index: {}]
  %s3 = inlined_call_operand.vmem [shape: f32[16,128], index: 3, kind: output, shape index: {}]
  %s4 = sld [smem:[#allocation0]]
  $region30: #{noise_ff_forward.1} parent=0
    _
  %s6 = ssub.s32 1, %s4
  %s7 = scalar_select 0, %s6, %s4
  // Predicated region
  $region2: #{noise_ff_forward.1} parent=0 // pred_check
    _
  $region3: #{noise_ff_forward.1} parent=0 // pred_check_branch
    %9 = sbr.rel (0) target = $region5
  $region4: #{noise_ff_forward.1} parent=0 // pred_region
    _
  $region5: #{noise_ff_forward.1} parent=0 // pred_fallthru
    _
  // Predicated region
  $region6: #{noise_ff_forward.1} parent=0 // pred_check
    _
  $region7: #{noise_ff_forward.1} parent=0 // pred_check_branch
    %11 = sbr.rel (0) target = $region9
  $region8: #{noise_ff_forward.1} parent=0 // pred_region
    _
  $region9: #{noise_ff_forward.1} parent=0 // pred_fallthru
    _
  // Predicated region
  $region10: #{noise_ff_forward.1} parent=0 // pred_check
    _
  $region11: #{noise_ff_forward.1} parent=0 // pred_check_branch
    %13 = sbr.rel (0) target = $region13
  $region12: #{noise_ff_forward.1} parent=0 // pred_region
    _
  $region13: #{noise_ff_forward.1} parent=0 // pred_fallthru
    _
  %p14 = scmp.eq.s32.totalorder 0, 0
  // Predicated region
  $region14: #{noise_ff_forward.1} parent=0 // pred_check
    %p15 = pneg %p14
  $region15: #{noise_ff_forward.1} parent=0 // pred_check_branch
    %17 = sbr.rel (%p15) target = $region17
  $region16: #{noise_ff_forward.1} parent=0 // pred_region
    %18 = vst [vmem:[#allocation2] sm:$0xff] 0.0
    %19 = vst [vmem:[#allocation2 + $0x8] sm:$0xff] 0.0
  $region17: #{noise_ff_forward.1} parent=0 // pred_fallthru
    _
  %v20 = vld [vmem:[%s0] sm:$0xff]
  %v21 = vld [vmem:[%s0 + $0x8] sm:$0xff]
  %v22 = vld [vmem:[%s1] sm:$0xff]
  %v23 = vld [vmem:[%s1 + $0x8] sm:$0xff]
  %v24 = vld [vmem:[%s1 + $0x10] sm:$0xff]
  %v25 = vld [vmem:[%s1 + $0x18] sm:$0xff]
  %v26 = vld [vmem:[%s1 + $0x20] sm:$0xff]
  %v27 = vld [vmem:[%s1 + $0x28] sm:$0xff]
  %v28 = vld [vmem:[%s1 + $0x30] sm:$0xff]
  %v29 = vld [vmem:[%s1 + $0x38] sm:$0xff]
  %v30 = vld [vmem:[%s1 + $0x40] sm:$0xff]
  %v31 = vld [vmem:[%s1 + $0x48] sm:$0xff]
  %v32 = vld [vmem:[%s1 + $0x50] sm:$0xff]
  %v33 = vld [vmem:[%s1 + $0x58] sm:$0xff]
  %v34 = vld [vmem:[%s1 + $0x60] sm:$0xff]
  %v35 = vld [vmem:[%s1 + $0x68] sm:$0xff]
  %v36 = vld [vmem:[%s1 + $0x70] sm:$0xff]
  %v37 = vld [vmem:[%s1 + $0x78] sm:$0xff]
  %38 = vmatpush.xpose.msra.mxu0 %v37
  %39 = vmatpush.xpose.msra.mxu0 %v36
  %40 = vmatpush.xpose.msra.mxu0 %v35
  %41 = vmatpush.xpose.msra.mxu0 %v34
  %42 = vmatpush.xpose.msra.mxu0 %v33
  %43 = vmatpush.xpose.msra.mxu0 %v32
  %44 = vmatpush.xpose.msra.mxu0 %v31
  %45 = vmatpush.xpose.msra.mxu0 %v30
  %46 = vmatpush.xpose.msra.mxu0 %v29
  %47 = vmatpush.xpose.msra.mxu0 %v28
  %48 = vmatpush.xpose.msra.mxu0 %v27
  %49 = vmatpush.xpose.msra.mxu0 %v26
  %50 = vmatpush.xpose.msra.mxu0 %v25
  %51 = vmatpush.xpose.msra.mxu0 %v24
  %52 = vmatpush.xpose.msra.mxu0 %v23
  %53 = vmatpush.xpose.msra.mxu0 %v22
  %54 = vmatmul.f32.gmra.mxu0 %v20
  %v55 = vpop.f32.mrf.mxu0
  %v56 = vadd.f32 0.0, %v55
  %57 = vmatmul.f32.gmra.mxu0 %v21
  %v58 = vpop.f32.mrf.mxu0
  %v59 = vadd.f32 0.0, %v58
  %60 = vdwg.mxu0
  %v61 = vmax.f32 %v56, 0.0
  %v62 = vmax.f32 %v59, 0.0
  %v63 = vld [vmem:[#allocation2] sm:$0xff]
  %v64 = vld [vmem:[#allocation2 + $0x8] sm:$0xff]
  %v65 = vld [vmem:[%s2] sm:$0xff]
  %v66 = vld [vmem:[%s2 + $0x8] sm:$0xff]
  %v67 = vld [vmem:[%s2 + $0x10] sm:$0xff]
  %v68 = vld [vmem:[%s2 + $0x18] sm:$0xff]
  %v69 = vld [vmem:[%s2 + $0x20] sm:$0xff]
  %v70 = vld [vmem:[%s2 + $0x28] sm:$0xff]
  %v71 = vld [vmem:[%s2 + $0x30] sm:$0xff]
  %v72 = vld [vmem:[%s2 + $0x38] sm:$0xff]
  %v73 = vld [vmem:[%s2 + $0x40] sm:$0xff]
  %v74 = vld [vmem:[%s2 + $0x48] sm:$0xff]
  %v75 = vld [vmem:[%s2 + $0x50] sm:$0xff]
  %v76 = vld [vmem:[%s2 + $0x58] sm:$0xff]
  %v77 = vld [vmem:[%s2 + $0x60] sm:$0xff]
  %v78 = vld [vmem:[%s2 + $0x68] sm:$0xff]
  %v79 = vld [vmem:[%s2 + $0x70] sm:$0xff]
  %v80 = vld [vmem:[%s2 + $0x78] sm:$0xff]
  %81 = vmatpush.xpose.msra.mxu0 %v80
  %82 = vmatpush.xpose.msra.mxu0 %v79
  %83 = vmatpush.xpose.msra.mxu0 %v78
  %84 = vmatpush.xpose.msra.mxu0 %v77
  %85 = vmatpush.xpose.msra.mxu0 %v76
  %86 = vmatpush.xpose.msra.mxu0 %v75
  %87 = vmatpush.xpose.msra.mxu0 %v74
  %88 = vmatpush.xpose.msra.mxu0 %v73
  %89 = vmatpush.xpose.msra.mxu0 %v72
  %90 = vmatpush.xpose.msra.mxu0 %v71
  %91 = vmatpush.xpose.msra.mxu0 %v70
  %92 = vmatpush.xpose.msra.mxu0 %v69
  %93 = vmatpush.xpose.msra.mxu0 %v68
  %94 = vmatpush.xpose.msra.mxu0 %v67
  %95 = vmatpush.xpose.msra.mxu0 %v66
  %96 = vmatpush.xpose.msra.mxu0 %v65
  %97 = vmatmul.f32.gmra.mxu0 %v61
  %v98 = vpop.f32.mrf.mxu0
  %v99 = vadd.f32 0.0, %v98
  %100 = vmatmul.f32.gmra.mxu0 %v62
  %v101 = vpop.f32.mrf.mxu0
  %v102 = vadd.f32 0.0, %v101
  %103 = vdwg.mxu0
  %v104 = vadd.f32 %v63, %v99
  %v105 = vadd.f32 %v64, %v102
  %106 = vst [vmem:[#allocation2] sm:$0xff] %v104
  %107 = vst [vmem:[#allocation2 + $0x8] sm:$0xff] %v105
  // Predicated region
  $region18: #{noise_ff_forward.1} parent=0 // pred_check
    %p108 = pneg %p14
  $region19: #{noise_ff_forward.1} parent=0 // pred_check_branch
    %110 = sbr.rel (%p108) target = $region21
  $region20: #{noise_ff_forward.1} parent=0 // pred_region
    %v111 = vld [vmem:[#allocation2] sm:$0xff]
    %v112 = vld [vmem:[#allocation2 + $0x8] sm:$0xff]
    %113 = vst [vmem:[%s3] sm:$0xff] %v111
    %114 = vst [vmem:[%s3 + $0x8] sm:$0xff] %v112
  $region21: #{noise_ff_forward.1} parent=0 // pred_fallthru
    _
  // Predicated region
  $region22: #{noise_ff_forward.1} parent=0 // pred_check
    _
  $region23: #{noise_ff_forward.1} parent=0 // pred_check_branch
    %116 = sbr.rel (0) target = $region25
  $region24: #{noise_ff_forward.1} parent=0 // pred_region
    _
  $region25: #{noise_ff_forward.1} parent=0 // pred_fallthru
    _
  // Predicated region
  $region26: #{noise_ff_forward.1} parent=0 // pred_check
    _
  $region27: #{noise_ff_forward.1} parent=0 // pred_check_branch
    %118 = sbr.rel (0) target = $region29
  $region28: #{noise_ff_forward.1} parent=0 // pred_region
    _
  $region29: #{noise_ff_forward.1} parent=0 // pred_fallthru
    _

</llo_original>
